<compile_context>
chip_gen: v5e
topology: v5e:2x2
jax: 0.10.0
libtpu: 0.0.40
codegen_flags: <defaults>
</compile_context>

<pallas_src>
import jax
import jax.numpy as jnp
from jax.experimental import pallas as pl
from jax.experimental.pallas import tpu as pltpu


def _attention_kernel(g_ref, x_ref, wg_ref, bg_ref, wx_ref, bx_ref,
                      wpsi_ref, bpsi_ref, up_ref, out_ref):
    x = x_ref[0, :, :]                       # (F_l, ts)  channels x fine spatial lanes
    g = g_ref[0, :, :]                       # (F_g, tg)  channels x coarse spatial lanes

    # g1 = BN(Conv1x1(Upsample(g))) == Upsample(BN(Conv1x1(g)))   (all pointwise)
    g1c = jnp.dot(wg_ref[...], g,
                  preferred_element_type=jnp.float32) + bg_ref[...]      # (F_int, tg)
    # nearest 2x2 upsample in flattened-lane space via constant 0/1 matrix
    # (exactly one 1 per output column -> exact value copy).
    g1 = jnp.dot(g1c, up_ref[...],
                 preferred_element_type=jnp.float32)                      # (F_int, ts)

    # x1 = BN(Conv1x1(x))
    x1 = jnp.dot(wx_ref[...], x,
                 preferred_element_type=jnp.float32) + bx_ref[...]        # (F_int, ts)

    h = jnp.maximum(g1 + x1, 0.0)

    # psi = sigmoid(BN(Conv1x1(h))), C_out == 1: VPU multiply + sublane sum
    # instead of a lane-sparse width-1 MXU matmul.
    logit = jnp.sum(h * wpsi_ref[...], axis=0, keepdims=True) + bpsi_ref[...]
    psi = jax.nn.sigmoid(logit)              # (1, ts), lane-dense

    out_ref[0, :, :] = (x * psi).astype(out_ref.dtype)


def _fold_bn(w, b, gamma, beta, mean, var, eps=1e-5):
    """Fold eval-mode BatchNorm into a 1x1 conv.  w: (C_out, C_in), b: (C_out,)."""
    scale = gamma / jnp.sqrt(var + eps)
    w_eff = w * scale[:, None]
    b_eff = (b - mean) * scale + beta
    return w_eff, b_eff


def _pick_spatial_tile(S, W, Hg, max_lanes):
    """Largest fine-spatial tile (in lanes) that
       * covers an even number of whole image rows (so every x tile maps to a
         contiguous block of coarse g rows),
       * divides S (no remainder tiles),
       * keeps both the x tile (ts) and the g tile (ts // 4) lane counts
         128-aligned unless the tile is the full image."""
    if S <= max_lanes:
        return S
    best = None
    for k in range(1, Hg + 1):
        if Hg % k:
            continue
        ts = 2 * W * k                     # k pairs of fine rows
        if ts > max_lanes:
            break
        if ts % 512 == 0:                  # ts % 128 == 0 and (ts // 4) % 128 == 0
            best = ts
    return best if best is not None else S


def attention_block(g, x, params, *, max_lanes=2048):
    """g: (N, F_g, Hg, Wg), x: (N, F_l, 2*Hg, 2*Wg) float32 (NCHW, like PyTorch)."""
    N, F_g, Hg, Wg = g.shape
    Nx, F_l, H, W = x.shape
    assert Nx == N and H == 2 * Hg and W == 2 * Wg

    # --- fold eval-mode BN into the 1x1 convs (weights stay (C_out, C_in)) ---
    wg, bg = _fold_bn(params["wg"], params["bg"], params["g_gamma"],
                      params["g_beta"], params["g_mean"], params["g_var"])
    wx, bx = _fold_bn(params["wx"], params["bx"], params["x_gamma"],
                      params["x_beta"], params["x_mean"], params["x_var"])
    wp, bp = _fold_bn(params["wpsi"], params["bpsi"], params["p_gamma"],
                      params["p_beta"], params["p_mean"], params["p_var"])
    F_int = wg.shape[0]

    # --- free reshapes: channels on sublanes, flattened spatial on lanes ---
    S, Sg = H * W, Hg * Wg
    x_flat = x.reshape(N, F_l, S)
    g_flat = g.reshape(N, F_g, Sg)

    ts = _pick_spatial_tile(S, W, Hg, max_lanes)    # fine spatial lanes per tile
    tg = ts // 4                                    # coarse spatial lanes per tile
    n_sp = S // ts                                  # always exact by construction

    # Constant 0/1 nearest-upsample expansion matrix for one tile: fine lane j'
    # (row-major over (th, W)) sources coarse lane (j'//(2W))*Wg + (j'%W)//2.
    jf = jnp.arange(ts)
    src = (jf // (2 * W)) * Wg + (jf % W) // 2
    up = (src[None, :] == jnp.arange(tg)[:, None]).astype(jnp.float32)   # (tg, ts)

    bg2 = bg.reshape(F_int, 1)
    bx2 = bx.reshape(F_int, 1)
    wp2 = wp.reshape(F_int, 1)          # (1, F_int) -> column vector for VPU reduce
    bp2 = bp.reshape(1, 1)

    grid = (N, n_sp)
    row_spec = lambda c, t: pl.BlockSpec((1, c, t), lambda n, i: (n, 0, i))
    full_spec = lambda r, c: pl.BlockSpec((r, c), lambda n, i: (0, 0))

    # Rough VMEM budget: double-buffered x/g/out streams + resident weights +
    # in-kernel f32 intermediates; raise the scoped limit accordingly.
    vmem_need = 4 * (4 * F_l * ts          # x in + out, double-buffered
                     + 2 * F_g * tg        # g in
                     + 2 * tg * ts         # expansion matrix
                     + 4 * F_int * ts      # g1c/g1/x1/h temporaries
                     + 2 * F_int * (F_g + F_l + 2) + 1024)
    vmem_limit = int(min(max(2 * vmem_need, 32 << 20), 64 << 20))

    out_flat = pl.pallas_call(
        _attention_kernel,
        out_shape=jax.ShapeDtypeStruct((N, F_l, S), x.dtype),
        grid_spec=pltpu.PrefetchScalarGridSpec(
            num_scalar_prefetch=0,
            grid=grid,
            in_specs=[
                row_spec(F_g, tg),          # g   (coarse spatial tile)
                row_spec(F_l, ts),          # x   (fine spatial tile)
                full_spec(F_int, F_g),      # Wg  (BN folded)
                full_spec(F_int, 1),        # bg
                full_spec(F_int, F_l),      # Wx  (BN folded)
                full_spec(F_int, 1),        # bx
                full_spec(F_int, 1),        # Wpsi (as column)
                full_spec(1, 1),            # bpsi
                full_spec(tg, ts),          # nearest-upsample expansion matrix
            ],
            out_specs=row_spec(F_l, ts),
        ),
        compiler_params=pltpu.CompilerParams(
            dimension_semantics=("parallel", "parallel"),
            vmem_limit_bytes=vmem_limit),
    )(g_flat, x_flat, wg, bg2, wx, bx2, wp2, bp2, up)

    # --- free reshape back to NCHW ---
    return out_flat.reshape(N, F_l, H, W)


def _reference(g, x, params):
    """Pure-JAX reference of the PyTorch forward (eval-mode BN)."""
    g_up = jnp.repeat(jnp.repeat(g, 2, axis=2), 2, axis=3)
    wg, bg = _fold_bn(params["wg"], params["bg"], params["g_gamma"],
                      params["g_beta"], params["g_mean"], params["g_var"])
    wx, bx = _fold_bn(params["wx"], params["bx"], params["x_gamma"],
                      params["x_beta"], params["x_mean"], params["x_var"])
    wp, bp = _fold_bn(params["wpsi"], params["bpsi"], params["p_gamma"],
                      params["p_beta"], params["p_mean"], params["p_var"])
    g1 = jnp.einsum("nchw,oc->nohw", g_up, wg) + bg[None, :, None, None]
    x1 = jnp.einsum("nchw,oc->nohw", x, wx) + bx[None, :, None, None]
    h = jnp.maximum(g1 + x1, 0.0)
    psi = jax.nn.sigmoid(
        jnp.einsum("nchw,oc->nohw", h, wp) + bp[None, :, None, None])
    return x * psi


def make_params(key, F_g, F_l, F_int):
    ks = jax.random.split(key, 6)
    return {
        "wg": jax.random.normal(ks[0], (F_int, F_g), jnp.float32) * 0.3,
        "bg": jax.random.normal(ks[1], (F_int,), jnp.float32) * 0.1,
        "wx": jax.random.normal(ks[2], (F_int, F_l), jnp.float32) * 0.3,
        "bx": jax.random.normal(ks[3], (F_int,), jnp.float32) * 0.1,
        "wpsi": jax.random.normal(ks[4], (1, F_int), jnp.float32) * 0.3,
        "bpsi": jax.random.normal(ks[5], (1,), jnp.float32) * 0.1,
        # eval-mode BatchNorm parameters (deterministic, non-trivial)
        "g_gamma": jnp.linspace(0.8, 1.2, F_int, dtype=jnp.float32),
        "g_beta": jnp.linspace(-0.1, 0.1, F_int, dtype=jnp.float32),
        "g_mean": jnp.linspace(-0.05, 0.05, F_int, dtype=jnp.float32),
        "g_var": jnp.linspace(0.9, 1.1, F_int, dtype=jnp.float32),
        "x_gamma": jnp.linspace(1.1, 0.9, F_int, dtype=jnp.float32),
        "x_beta": jnp.linspace(0.05, -0.05, F_int, dtype=jnp.float32),
        "x_mean": jnp.linspace(0.02, -0.02, F_int, dtype=jnp.float32),
        "x_var": jnp.linspace(1.05, 0.95, F_int, dtype=jnp.float32),
        "p_gamma": jnp.array([1.05], jnp.float32),
        "p_beta": jnp.array([0.02], jnp.float32),
        "p_mean": jnp.array([0.01], jnp.float32),
        "p_var": jnp.array([0.98], jnp.float32),
    }


if __name__ == "__main__":
    key = jax.random.PRNGKey(0)
    kg, kx, kp, kg2, kx2, kp2 = jax.random.split(key, 6)

    # --- test 1: module-sized demo (whole image fits in one spatial tile) ---
    N, F_g, F_l, F_int = 2, 4, 4, 8
    Hg = Wg = 8                         # g spatial; x spatial is 2x (16x16)
    g = jax.random.normal(kg, (N, F_g, Hg, Wg), jnp.float32)
    x = jax.random.normal(kx, (N, F_l, 2 * Hg, 2 * Wg), jnp.float32)
    params = make_params(kp, F_g, F_l, F_int)

    out = jax.block_until_ready(attention_block(g, x, params))
    ref = _reference(g, x, params)
    assert out.shape == x.shape
    assert jnp.allclose(out, ref, atol=1e-4, rtol=1e-4), (
        float(jnp.max(jnp.abs(out - ref))))

    # --- test 2: larger spatial extent, forces the multi-tile (tiled) path ---
    N2, F_g2, F_l2, F_int2 = 1, 8, 8, 16
    Hg2 = Wg2 = 16                      # x spatial 32x32 -> S=1024, tiles of 512
    g2 = jax.random.normal(kg2, (N2, F_g2, Hg2, Wg2), jnp.float32)
    x2 = jax.random.normal(kx2, (N2, F_l2, 2 * Hg2, 2 * Wg2), jnp.float32)
    params2 = make_params(kp2, F_g2, F_l2, F_int2)

    out2 = jax.block_until_ready(attention_block(g2, x2, params2, max_lanes=512))
    ref2 = _reference(g2, x2, params2)
    assert out2.shape == x2.shape
    assert jnp.allclose(out2, ref2, atol=1e-4, rtol=1e-4), (
        float(jnp.max(jnp.abs(out2 - ref2))))

    print("KERNEL_OK")
</pallas_src>

<mosaic_0001>
module attributes {stable_mosaic.version = 11 : i64} {
  func.func @_attention_kernel(%arg0: i32, %arg1: i32, %arg2: memref<1x4x64xf32, #tpu.memory_space<vmem>>, %arg3: memref<1x4x256xf32, #tpu.memory_space<vmem>>, %arg4: memref<8x4xf32, #tpu.memory_space<vmem>>, %arg5: memref<8x1xf32, #tpu.memory_space<vmem>>, %arg6: memref<8x4xf32, #tpu.memory_space<vmem>>, %arg7: memref<8x1xf32, #tpu.memory_space<vmem>>, %arg8: memref<8x1xf32, #tpu.memory_space<vmem>>, %arg9: memref<1x1xf32, #tpu.memory_space<vmem>>, %arg10: memref<64x256xf32, #tpu.memory_space<vmem>>, %arg11: memref<1x4x256xf32, #tpu.memory_space<vmem>>) attributes {dimension_semantics = [#tpu.dimension_semantics<parallel>, #tpu.dimension_semantics<parallel>], iteration_bounds = array<i64: 2, 1>, scalar_prefetch = 0 : i64, scratch_operands = 0 : i64, tpu.core_type = #tpu.core_type<tc>, window_params = [{transform_indices = @transform_0, window_bounds = array<i64: 1, 4, 64>}, {transform_indices = @transform_1, window_bounds = array<i64: 1, 4, 256>}, {pipeline_mode = #tpu.pipeline_mode<synchronous>, transform_indices = @transform_2, window_bounds = array<i64: 8, 4>}, {pipeline_mode = #tpu.pipeline_mode<synchronous>, transform_indices = @transform_3, window_bounds = array<i64: 8, 1>}, {pipeline_mode = #tpu.pipeline_mode<synchronous>, transform_indices = @transform_4, window_bounds = array<i64: 8, 4>}, {pipeline_mode = #tpu.pipeline_mode<synchronous>, transform_indices = @transform_5, window_bounds = array<i64: 8, 1>}, {pipeline_mode = #tpu.pipeline_mode<synchronous>, transform_indices = @transform_6, window_bounds = array<i64: 8, 1>}, {pipeline_mode = #tpu.pipeline_mode<synchronous>, transform_indices = @transform_7, window_bounds = array<i64: 1, 1>}, {pipeline_mode = #tpu.pipeline_mode<synchronous>, transform_indices = @transform_8, window_bounds = array<i64: 64, 256>}, {transform_indices = @transform_9, window_bounds = array<i64: 1, 4, 256>}]} {
    %c0 = arith.constant 0 : index
    %c0_0 = arith.constant 0 : index
    %c0_1 = arith.constant 0 : index
    %0 = vector.load %arg3[%c0, %c0_0, %c0_1] : memref<1x4x256xf32, #tpu.memory_space<vmem>>, vector<1x4x256xf32>
    %1 = vector.shape_cast %0 : vector<1x4x256xf32> to vector<4x256xf32>
    %c0_2 = arith.constant 0 : index
    %c0_3 = arith.constant 0 : index
    %c0_4 = arith.constant 0 : index
    %2 = vector.load %arg2[%c0_2, %c0_3, %c0_4] : memref<1x4x64xf32, #tpu.memory_space<vmem>>, vector<1x4x64xf32>
    %3 = vector.shape_cast %2 : vector<1x4x64xf32> to vector<4x64xf32>
    %c0_5 = arith.constant 0 : index
    %c0_6 = arith.constant 0 : index
    %4 = vector.load %arg4[%c0_5, %c0_6] : memref<8x4xf32, #tpu.memory_space<vmem>>, vector<8x4xf32>
    %cst = arith.constant dense<0.000000e+00> : vector<8x64xf32>
    %5 = tpu.matmul %4, %3, %cst {dimension_numbers = #tpu.dot_dimension_numbers<[1], [0], [0], [1], [0, 0, 1, 1], [], []>} : vector<8x4xf32>, vector<4x64xf32>, vector<8x64xf32> -> vector<8x64xf32>
    %c0_7 = arith.constant 0 : index
    %c0_8 = arith.constant 0 : index
    %6 = vector.load %arg5[%c0_7, %c0_8] : memref<8x1xf32, #tpu.memory_space<vmem>>, vector<8x1xf32>
    %7 = vector.broadcast %6 : vector<8x1xf32> to vector<8x64xf32>
    %8 = arith.addf %5, %7 : vector<8x64xf32>
    %c0_9 = arith.constant 0 : index
    %c0_10 = arith.constant 0 : index
    %9 = vector.load %arg10[%c0_9, %c0_10] : memref<64x256xf32, #tpu.memory_space<vmem>>, vector<64x256xf32>
    %cst_11 = arith.constant dense<0.000000e+00> : vector<8x256xf32>
    %10 = tpu.matmul %8, %9, %cst_11 {dimension_numbers = #tpu.dot_dimension_numbers<[1], [0], [0], [1], [0, 0, 1, 1], [], []>} : vector<8x64xf32>, vector<64x256xf32>, vector<8x256xf32> -> vector<8x256xf32>
    %c0_12 = arith.constant 0 : index
    %c0_13 = arith.constant 0 : index
    %11 = vector.load %arg6[%c0_12, %c0_13] : memref<8x4xf32, #tpu.memory_space<vmem>>, vector<8x4xf32>
    %cst_14 = arith.constant dense<0.000000e+00> : vector<8x256xf32>
    %12 = tpu.matmul %11, %1, %cst_14 {dimension_numbers = #tpu.dot_dimension_numbers<[1], [0], [0], [1], [0, 0, 1, 1], [], []>} : vector<8x4xf32>, vector<4x256xf32>, vector<8x256xf32> -> vector<8x256xf32>
    %c0_15 = arith.constant 0 : index
    %c0_16 = arith.constant 0 : index
    %13 = vector.load %arg7[%c0_15, %c0_16] : memref<8x1xf32, #tpu.memory_space<vmem>>, vector<8x1xf32>
    %14 = vector.broadcast %13 : vector<8x1xf32> to vector<8x256xf32>
    %15 = arith.addf %12, %14 : vector<8x256xf32>
    %16 = arith.addf %10, %15 : vector<8x256xf32>
    %cst_17 = arith.constant 0.000000e+00 : f32
    %17 = vector.broadcast %cst_17 : f32 to vector<8x256xf32>
    %18 = arith.maximumf %16, %17 : vector<8x256xf32>
    %c0_18 = arith.constant 0 : index
    %c0_19 = arith.constant 0 : index
    %19 = vector.load %arg8[%c0_18, %c0_19] : memref<8x1xf32, #tpu.memory_space<vmem>>, vector<8x1xf32>
    %20 = vector.broadcast %19 : vector<8x1xf32> to vector<8x256xf32>
    %21 = arith.mulf %18, %20 : vector<8x256xf32>
    %cst_20 = arith.constant dense<0.000000e+00> : vector<256xf32>
    %22 = vector.multi_reduction <add>, %21, %cst_20 [0] : vector<8x256xf32> to vector<256xf32>
    %23 = vector.shape_cast %22 : vector<256xf32> to vector<1x256xf32>
    %c0_21 = arith.constant 0 : index
    %c0_22 = arith.constant 0 : index
    %24 = vector.load %arg9[%c0_21, %c0_22] : memref<1x1xf32, #tpu.memory_space<vmem>>, vector<1x1xf32>
    %25 = vector.broadcast %24 : vector<1x1xf32> to vector<1x256xf32>
    %26 = arith.addf %23, %25 : vector<1x256xf32>
    %27 = arith.negf %26 : vector<1x256xf32>
    %28 = math.exp %27 : vector<1x256xf32>
    %cst_23 = arith.constant 1.000000e+00 : f32
    %29 = vector.broadcast %cst_23 : f32 to vector<1x256xf32>
    %30 = arith.addf %29, %28 : vector<1x256xf32>
    %31 = arith.divf %29, %30 : vector<1x256xf32>
    %32 = vector.broadcast %31 : vector<1x256xf32> to vector<4x256xf32>
    %33 = arith.mulf %1, %32 : vector<4x256xf32>
    %c0_24 = arith.constant 0 : index
    %c0_25 = arith.constant 0 : index
    %c0_26 = arith.constant 0 : index
    %34 = vector.load %arg11[%c0_24, %c0_25, %c0_26] : memref<1x4x256xf32, #tpu.memory_space<vmem>>, vector<1x4x256xf32>
    %35 = vector.shape_cast %34 : vector<1x4x256xf32> to vector<4x256xf32>
    %36 = vector.shape_cast %33 : vector<4x256xf32> to vector<1x4x256xf32>
    tpu.vector_store %arg11[%c0_24, %c0_25, %c0_26], %36 {strides = array<i32>} : memref<1x4x256xf32, #tpu.memory_space<vmem>>, vector<1x4x256xf32>,
    return
  }
  func.func @transform_0(%arg0: i32, %arg1: i32) -> (i32, i32, i32) {
    %c0_i32 = arith.constant 0 : i32
    %c0_i32_0 = arith.constant 0 : i32
    return %arg0, %c0_i32, %arg1 : i32, i32, i32
  }
  func.func @transform_1(%arg0: i32, %arg1: i32) -> (i32, i32, i32) {
    %c0_i32 = arith.constant 0 : i32
    %c0_i32_0 = arith.constant 0 : i32
    return %arg0, %c0_i32, %arg1 : i32, i32, i32
  }
  func.func @transform_2(%arg0: i32, %arg1: i32) -> (i32, i32) {
    %c0_i32 = arith.constant 0 : i32
    %c0_i32_0 = arith.constant 0 : i32
    %c0_i32_1 = arith.constant 0 : i32
    return %c0_i32, %c0_i32_0 : i32, i32
  }
  func.func @transform_3(%arg0: i32, %arg1: i32) -> (i32, i32) {
    %c0_i32 = arith.constant 0 : i32
    %c0_i32_0 = arith.constant 0 : i32
    %c0_i32_1 = arith.constant 0 : i32
    return %c0_i32, %c0_i32_0 : i32, i32
  }
  func.func @transform_4(%arg0: i32, %arg1: i32) -> (i32, i32) {
    %c0_i32 = arith.constant 0 : i32
    %c0_i32_0 = arith.constant 0 : i32
    %c0_i32_1 = arith.constant 0 : i32
    return %c0_i32, %c0_i32_0 : i32, i32
  }
  func.func @transform_5(%arg0: i32, %arg1: i32) -> (i32, i32) {
    %c0_i32 = arith.constant 0 : i32
    %c0_i32_0 = arith.constant 0 : i32
    %c0_i32_1 = arith.constant 0 : i32
    return %c0_i32, %c0_i32_0 : i32, i32
  }
  func.func @transform_6(%arg0: i32, %arg1: i32) -> (i32, i32) {
    %c0_i32 = arith.constant 0 : i32
    %c0_i32_0 = arith.constant 0 : i32
    %c0_i32_1 = arith.constant 0 : i32
    return %c0_i32, %c0_i32_0 : i32, i32
  }
  func.func @transform_7(%arg0: i32, %arg1: i32) -> (i32, i32) {
    %c0_i32 = arith.constant 0 : i32
    %c0_i32_0 = arith.constant 0 : i32
    %c0_i32_1 = arith.constant 0 : i32
    return %c0_i32, %c0_i32_0 : i32, i32
  }
  func.func @transform_8(%arg0: i32, %arg1: i32) -> (i32, i32) {
    %c0_i32 = arith.constant 0 : i32
    %c0_i32_0 = arith.constant 0 : i32
    %c0_i32_1 = arith.constant 0 : i32
    return %c0_i32, %c0_i32_0 : i32, i32
  }
  func.func @transform_9(%arg0: i32, %arg1: i32) -> (i32, i32, i32) {
    %c0_i32 = arith.constant 0 : i32
    %c0_i32_0 = arith.constant 0 : i32
    return %arg0, %c0_i32, %arg1 : i32, i32, i32
  }
}

</mosaic_0001>

<llo_original>
// kernel: tpu_custom_call.1
$region0: #{tpu_custom_call.1}
  #allocation0 [shape = 'u32[]', space=smem, size = 0x4, offset = 0x4, fixed_abs, tag = 'smem constant byte address 0x4 - core index']
  #allocation1 [shape = 'u32[72,128]{1,0:T(1,128)}', space=vmem, size = 0x9000, scoped, tag = 'internal scratch']
  #allocation2 [shape = 'f32[1,1]{1,0:T(1,128)S(1)}', space=vmem, size = 0x200, scoped, tag = 'scoped memory for tpu_custom_call.1']
  %s0 = inlined_call_operand.vmem [shape: f32[2,4,64], index: 0, kind: input, shape index: {}]
  %s1 = inlined_call_operand.vmem [shape: f32[2,4,256], index: 1, kind: input, shape index: {}]
  %s2 = inlined_call_operand.vmem [shape: f32[8,4], index: 2, kind: input, shape index: {}]
  %s3 = inlined_call_operand.vmem [shape: f32[8,1], index: 3, kind: input, shape index: {}]
  %s4 = inlined_call_operand.vmem [shape: f32[8,4], index: 4, kind: input, shape index: {}]
  %s5 = inlined_call_operand.vmem [shape: f32[8,1], index: 5, kind: input, shape index: {}]
  %s6 = inlined_call_operand.vmem [shape: f32[8,1], index: 6, kind: input, shape index: {}]
  %s7 = inlined_call_operand.<no memory space> [shape: f32[1,1], index: 7, kind: input, shape index: {}]
  %s8 = inlined_call_operand.hbm [shape: f32[64,256], index: 8, kind: input, shape index: {}]
  %s9 = inlined_call_operand.hbm [shape: f32[2,4,256], index: 9, kind: output, shape index: {}]
  %s10 = sld [smem:[#allocation0]]
  $region73: #{tpu_custom_call.1} parent=0
    _
  %s12 = ssub.s32 1, %s10
  %s13 = scalar_select 0, %s12, %s10
  %v14 = vstv %s7
  %15 = vst [vmem:[#allocation2] sm:$0x1] %v14
  $region1: #{tpu_custom_call.1} parent=0
    #allocation3 [shape = 'u8[65536]{0}', space=vmem, size = 0x10000, scoped, tag = 'input window, operand 8, single buffered']
    #allocation4 [shape = 's32[2]{0}', space=sflag, size = 0x8, scoped, tag = 'scoped memory for tpu_custom_call.1']
    #allocation5 [shape = 's32[2]{0}', space=sflag, size = 0x8, scoped, tag = 'scoped memory for tpu_custom_call.1']
    #allocation6 [shape = 'u8[8192]{0}', space=vmem, size = 0x2000, scoped, tag = 'output window, operand 0']
    %16 = vsyncpa [#allocation4], 0
    %17 = vsyncpa [#allocation5], 0
    %s18 = scalar_lea.sflag [#allocation5], 1
    %19 = vsyncpa %s18, 0
    loop: start=0, step=1, limit=4
    $region2: #{tpu_custom_call.1} parent=1 // loop_pre_header
      _
    $region3: #{tpu_custom_call.1} parent=1 // loop_header
      %s21 = sphi 0, %s25
      %p22 = scmp.ge.s32.totalorder %s21, 4
      %s28 = sphi 0, %s40
      %s29 = sphi 0, %s36
      %s30 = sphi 0, %s28
      %s31 = sphi 0, %s29
      %s32 = sphi 0, %s30
      %s33 = sphi 0, %s31
      %s45 = sphi 0, %s47
      %s48 = sphi 0, %s45
      %s49 = sphi 0, %s48
      %s65 = sphi 0, %s49
      %s73 = sphi 0, %s75
      %s76 = sphi 0, %s73
      %s77 = sphi 0, %s76
      %s93 = sphi 0, %s77
      %s97 = sphi 0, %s97
      %s99 = sphi 0, %s97
      %s100 = sphi 0, %s99
      %s114 = sphi 0, %s100
      %s118 = sphi 0, %s118
      %s120 = sphi 0, %s118
      %s121 = sphi 0, %s120
      %s135 = sphi 0, %s121
      %s139 = sphi 0, %s139
      %s141 = sphi 0, %s139
      %s142 = sphi 0, %s141
      %s156 = sphi 0, %s142
      %s160 = sphi 0, %s160
      %s162 = sphi 0, %s160
      %s163 = sphi 0, %s162
      %s177 = sphi 0, %s163
      %s181 = sphi 0, %s181
      %s183 = sphi 0, %s181
      %s184 = sphi 0, %s183
      %s198 = sphi 0, %s184
      %s202 = sphi 0, %s202
      %s204 = sphi 0, %s202
      %s205 = sphi 0, %s204
      %s219 = sphi 0, %s205
      %s223 = sphi 0, %s223
      %s225 = sphi 0, %s223
      %s226 = sphi 0, %s225
      %s240 = sphi 0, %s226
      %s248 = sphi 0, %s250
      %s251 = sphi 0, %s248
      %s252 = sphi 0, %s251
      %s268 = sphi 0, %s252
    $region4: #{tpu_custom_call.1} parent=1 // loop_header_branch
      %24 = sbr.rel (%p22) target = $region8
    $region5: #{tpu_custom_call.1} parent=1 // loop_body
      %s26 = ssub.s32 %s21, 1
      %s27 = ssub.s32 %s21, 2
      %s34 = sadd.s32 1, %s29
      %p35 = scmp.ge.s32.totalorder %s34, 1
      %s36 = scalar_select %p35, 0, %s34
      %s37 = sadd.s32 1, %s28
      %s38 = scalar_select %p35, %s37, %s28
      %p39 = scmp.ge.s32.totalorder %s38, 2
      %s40 = scalar_select %p39, 0, %s38
      %s41 = ssub.s32 %s28, %s40
      %s42 = ssub.s32 %s29, %s36
      %s43 = sor.u32 %s41, %s42
      %p44 = scmp.eq.s32.totalorder %s43, 0
      %s46 = sadd.s32 %s45, 1
      %s47 = scalar_select %p44, %s45, %s46
      %p50 = pneg %p44
      %p51 = scmp.eq.s32.totalorder %s21, 1
      %p52 = por %p50, %p51
      %p53 = scmp.ne.s32.totalorder %s45, %s48
      %p54 = scmp.eq.s32.totalorder %s21, 0
      %p55 = por %p53, %p54
      %p56 = scmp.ne.s32.totalorder %s45, %s48
      %p57 = scmp.eq.s32.totalorder %s26, 1
      %p58 = por %p56, %p57
      %p59 = scmp.ne.s32.totalorder %s48, %s49
      %p60 = scmp.eq.s32.totalorder %s26, 0
      %p61 = por %p59, %p60
      %p62 = scmp.ne.s32.totalorder %s48, %s49
      %p63 = scmp.eq.s32.totalorder %s27, 1
      %p64 = por %p62, %p63
      %p66 = scmp.ne.s32.totalorder %s49, %s65
      %p67 = scmp.eq.s32.totalorder %s27, 0
      %p68 = por %p66, %p67
      %s69 = ssub.s32 %s28, %s40
      %s70 = ssub.s32 %s29, %s36
      %s71 = sor.u32 %s69, %s70
      %p72 = scmp.eq.s32.totalorder %s71, 0
      %s74 = sadd.s32 %s73, 1
      %s75 = scalar_select %p72, %s73, %s74
      %p78 = pneg %p72
      %p79 = scmp.eq.s32.totalorder %s21, 1
      %p80 = por %p78, %p79
      %p81 = scmp.ne.s32.totalorder %s73, %s76
      %p82 = scmp.eq.s32.totalorder %s21, 0
      %p83 = por %p81, %p82
      %p84 = scmp.ne.s32.totalorder %s73, %s76
      %p85 = scmp.eq.s32.totalorder %s26, 1
      %p86 = por %p84, %p85
      %p87 = scmp.ne.s32.totalorder %s76, %s77
      %p88 = scmp.eq.s32.totalorder %s26, 0
      %p89 = por %p87, %p88
      %p90 = scmp.ne.s32.totalorder %s76, %s77
      %p91 = scmp.eq.s32.totalorder %s27, 1
      %p92 = por %p90, %p91
      %p94 = scmp.ne.s32.totalorder %s77, %s93
      %p95 = scmp.eq.s32.totalorder %s27, 0
      %p96 = por %p94, %p95
      %s98 = sadd.s32 %s97, 1
      %p101 = scmp.eq.s32.totalorder %s21, 1
      %p102 = scmp.ne.s32.totalorder %s97, %s99
      %p103 = scmp.eq.s32.totalorder %s21, 0
      %p104 = por %p102, %p103
      %p105 = scmp.ne.s32.totalorder %s97, %s99
      %p106 = scmp.eq.s32.totalorder %s26, 1
      %p107 = por %p105, %p106
      %p108 = scmp.ne.s32.totalorder %s99, %s100
      %p109 = scmp.eq.s32.totalorder %s26, 0
      %p110 = por %p108, %p109
      %p111 = scmp.ne.s32.totalorder %s99, %s100
      %p112 = scmp.eq.s32.totalorder %s27, 1
      %p113 = por %p111, %p112
      %p115 = scmp.ne.s32.totalorder %s100, %s114
      %p116 = scmp.eq.s32.totalorder %s27, 0
      %p117 = por %p115, %p116
      %s119 = sadd.s32 %s118, 1
      %p122 = scmp.eq.s32.totalorder %s21, 1
      %p123 = scmp.ne.s32.totalorder %s118, %s120
      %p124 = scmp.eq.s32.totalorder %s21, 0
      %p125 = por %p123, %p124
      %p126 = scmp.ne.s32.totalorder %s118, %s120
      %p127 = scmp.eq.s32.totalorder %s26, 1
      %p128 = por %p126, %p127
      %p129 = scmp.ne.s32.totalorder %s120, %s121
      %p130 = scmp.eq.s32.totalorder %s26, 0
      %p131 = por %p129, %p130
      %p132 = scmp.ne.s32.totalorder %s120, %s121
      %p133 = scmp.eq.s32.totalorder %s27, 1
      %p134 = por %p132, %p133
      %p136 = scmp.ne.s32.totalorder %s121, %s135
      %p137 = scmp.eq.s32.totalorder %s27, 0
      %p138 = por %p136, %p137
      %s140 = sadd.s32 %s139, 1
      %p143 = scmp.eq.s32.totalorder %s21, 1
      %p144 = scmp.ne.s32.totalorder %s139, %s141
      %p145 = scmp.eq.s32.totalorder %s21, 0
      %p146 = por %p144, %p145
      %p147 = scmp.ne.s32.totalorder %s139, %s141
      %p148 = scmp.eq.s32.totalorder %s26, 1
      %p149 = por %p147, %p148
      %p150 = scmp.ne.s32.totalorder %s141, %s142
      %p151 = scmp.eq.s32.totalorder %s26, 0
      %p152 = por %p150, %p151
      %p153 = scmp.ne.s32.totalorder %s141, %s142
      %p154 = scmp.eq.s32.totalorder %s27, 1
      %p155 = por %p153, %p154
      %p157 = scmp.ne.s32.totalorder %s142, %s156
      %p158 = scmp.eq.s32.totalorder %s27, 0
      %p159 = por %p157, %p158
      %s161 = sadd.s32 %s160, 1
      %p164 = scmp.eq.s32.totalorder %s21, 1
      %p165 = scmp.ne.s32.totalorder %s160, %s162
      %p166 = scmp.eq.s32.totalorder %s21, 0
      %p167 = por %p165, %p166
      %p168 = scmp.ne.s32.totalorder %s160, %s162
      %p169 = scmp.eq.s32.totalorder %s26, 1
      %p170 = por %p168, %p169
      %p171 = scmp.ne.s32.totalorder %s162, %s163
      %p172 = scmp.eq.s32.totalorder %s26, 0
      %p173 = por %p171, %p172
      %p174 = scmp.ne.s32.totalorder %s162, %s163
      %p175 = scmp.eq.s32.totalorder %s27, 1
      %p176 = por %p174, %p175
      %p178 = scmp.ne.s32.totalorder %s163, %s177
      %p179 = scmp.eq.s32.totalorder %s27, 0
      %p180 = por %p178, %p179
      %s182 = sadd.s32 %s181, 1
      %p185 = scmp.eq.s32.totalorder %s21, 1
      %p186 = scmp.ne.s32.totalorder %s181, %s183
      %p187 = scmp.eq.s32.totalorder %s21, 0
      %p188 = por %p186, %p187
      %p189 = scmp.ne.s32.totalorder %s181, %s183
      %p190 = scmp.eq.s32.totalorder %s26, 1
      %p191 = por %p189, %p190
      %p192 = scmp.ne.s32.totalorder %s183, %s184
      %p193 = scmp.eq.s32.totalorder %s26, 0
      %p194 = por %p192, %p193
      %p195 = scmp.ne.s32.totalorder %s183, %s184
      %p196 = scmp.eq.s32.totalorder %s27, 1
      %p197 = por %p195, %p196
      %p199 = scmp.ne.s32.totalorder %s184, %s198
      %p200 = scmp.eq.s32.totalorder %s27, 0
      %p201 = por %p199, %p200
      %s203 = sadd.s32 %s202, 1
      %p206 = scmp.eq.s32.totalorder %s21, 1
      %p207 = scmp.ne.s32.totalorder %s202, %s204
      %p208 = scmp.eq.s32.totalorder %s21, 0
      %p209 = por %p207, %p208
      %p210 = scmp.ne.s32.totalorder %s202, %s204
      %p211 = scmp.eq.s32.totalorder %s26, 1
      %p212 = por %p210, %p211
      %p213 = scmp.ne.s32.totalorder %s204, %s205
      %p214 = scmp.eq.s32.totalorder %s26, 0
      %p215 = por %p213, %p214
      %p216 = scmp.ne.s32.totalorder %s204, %s205
      %p217 = scmp.eq.s32.totalorder %s27, 1
      %p218 = por %p216, %p217
      %p220 = scmp.ne.s32.totalorder %s205, %s219
      %p221 = scmp.eq.s32.totalorder %s27, 0
      %p222 = por %p220, %p221
      %s224 = sadd.s32 %s223, 1
      %p227 = scmp.eq.s32.totalorder %s21, 1
      %p228 = scmp.ne.s32.totalorder %s223, %s225
      %p229 = scmp.eq.s32.totalorder %s21, 0
      %p230 = por %p228, %p229
      %p231 = scmp.ne.s32.totalorder %s223, %s225
      %p232 = scmp.eq.s32.totalorder %s26, 1
      %p233 = por %p231, %p232
      %p234 = scmp.ne.s32.totalorder %s225, %s226
      %p235 = scmp.eq.s32.totalorder %s26, 0
      %p236 = por %p234, %p235
      %p237 = scmp.ne.s32.totalorder %s225, %s226
      %p238 = scmp.eq.s32.totalorder %s27, 1
      %p239 = por %p237, %p238
      %p241 = scmp.ne.s32.totalorder %s226, %s240
      %p242 = scmp.eq.s32.totalorder %s27, 0
      %p243 = por %p241, %p242
      %s244 = ssub.s32 %s28, %s40
      %s245 = ssub.s32 %s29, %s36
      %s246 = sor.u32 %s244, %s245
      %p247 = scmp.eq.s32.totalorder %s246, 0
      %s249 = sadd.s32 %s248, 1
      %s250 = scalar_select %p247, %s248, %s249
      %p253 = pneg %p247
      %p254 = scmp.eq.s32.totalorder %s21, 1
      %p255 = por %p253, %p254
      %p256 = scmp.ne.s32.totalorder %s248, %s251
      %p257 = scmp.eq.s32.totalorder %s21, 0
      %p258 = por %p256, %p257
      %p259 = scmp.ne.s32.totalorder %s248, %s251
      %p260 = scmp.eq.s32.totalorder %s26, 1
      %p261 = por %p259, %p260
      %p262 = scmp.ne.s32.totalorder %s251, %s252
      %p263 = scmp.eq.s32.totalorder %s26, 0
      %p264 = por %p262, %p263
      %p265 = scmp.ne.s32.totalorder %s251, %s252
      %p266 = scmp.eq.s32.totalorder %s27, 1
      %p267 = por %p265, %p266
      %p269 = scmp.ne.s32.totalorder %s252, %s268
      %p270 = scmp.eq.s32.totalorder %s27, 0
      %p271 = por %p269, %p270
      %p272 = scmp.le.s32.totalorder 1, %s21
      %p273 = scmp.lt.s32.totalorder %s21, 3
      %p274 = pnand %p272, %p273
      %p275 = pneg %p274
      // Predicated region
      $region9: #{tpu_custom_call.1} parent=5 // pred_check
        _
      $region10: #{tpu_custom_call.1} parent=5 // pred_check_branch
        %277 = sbr.rel (%p274) target = $region12
      $region11: #{tpu_custom_call.1} parent=5 // pred_region
        %s278 = ssub.s32 %s21, 1
        // Predicated region
        $region13: #{tpu_custom_call.1} parent=11 // pred_check
          %p279 = pneg %p110
        $region14: #{tpu_custom_call.1} parent=11 // pred_check_branch
          %281 = sbr.rel (%p279) target = $region16
        $region15: #{tpu_custom_call.1} parent=11 // pred_region
          _
        $region16: #{tpu_custom_call.1} parent=11 // pred_fallthru
          _
        // Predicated region
        $region17: #{tpu_custom_call.1} parent=11 // pred_check
          %p282 = pneg %p131
        $region18: #{tpu_custom_call.1} parent=11 // pred_check_branch
          %284 = sbr.rel (%p282) target = $region20
        $region19: #{tpu_custom_call.1} parent=11 // pred_region
          _
        $region20: #{tpu_custom_call.1} parent=11 // pred_fallthru
          _
        // Predicated region
        $region21: #{tpu_custom_call.1} parent=11 // pred_check
          %p285 = pneg %p152
        $region22: #{tpu_custom_call.1} parent=11 // pred_check_branch
          %287 = sbr.rel (%p285) target = $region24
        $region23: #{tpu_custom_call.1} parent=11 // pred_region
          _
        $region24: #{tpu_custom_call.1} parent=11 // pred_fallthru
          _
        // Predicated region
        $region25: #{tpu_custom_call.1} parent=11 // pred_check
          %p288 = pneg %p173
        $region26: #{tpu_custom_call.1} parent=11 // pred_check_branch
          %290 = sbr.rel (%p288) target = $region28
        $region27: #{tpu_custom_call.1} parent=11 // pred_region
          _
        $region28: #{tpu_custom_call.1} parent=11 // pred_fallthru
          _
        // Predicated region
        $region29: #{tpu_custom_call.1} parent=11 // pred_check
          %p291 = pneg %p194
        $region30: #{tpu_custom_call.1} parent=11 // pred_check_branch
          %293 = sbr.rel (%p291) target = $region32
        $region31: #{tpu_custom_call.1} parent=11 // pred_region
          _
        $region32: #{tpu_custom_call.1} parent=11 // pred_fallthru
          _
        // Predicated region
        $region33: #{tpu_custom_call.1} parent=11 // pred_check
          %p294 = pneg %p215
        $region34: #{tpu_custom_call.1} parent=11 // pred_check_branch
          %296 = sbr.rel (%p294) target = $region36
        $region35: #{tpu_custom_call.1} parent=11 // pred_region
          _
        $region36: #{tpu_custom_call.1} parent=11 // pred_fallthru
          _
        // Predicated region
        $region37: #{tpu_custom_call.1} parent=11 // pred_check
          %p297 = pneg %p236
        $region38: #{tpu_custom_call.1} parent=11 // pred_check_branch
          %299 = sbr.rel (%p297) target = $region40
        $region39: #{tpu_custom_call.1} parent=11 // pred_region
          %301 = vsyncadd [#allocation4], 0
          %s302 = sshll.u32 %s8, 4
          %s303 = int_to_ptr.hbm [resolvable:$true] %s302
          %s304 = sshll.u32 [#allocation3], 4
          %s305 = int_to_ptr.vmem [resolvable:$true] %s304
          %310 = dma.hbm_to_vmem [thread:$0]  %s303, 2048, %s305, [#allocation4], 256, 256, 16
        $region40: #{tpu_custom_call.1} parent=11 // pred_fallthru
          _
      $region12: #{tpu_custom_call.1} parent=5 // pred_fallthru
        _
      %p311 = scmp.lt.s32.totalorder %s21, 2
      // Predicated region
      $region41: #{tpu_custom_call.1} parent=5 // pred_check
        %p312 = pneg %p311
      $region42: #{tpu_custom_call.1} parent=5 // pred_check_branch
        %314 = sbr.rel (%p312) target = $region44
      $region43: #{tpu_custom_call.1} parent=5 // pred_region
        // Predicated region
        $region45: #{tpu_custom_call.1} parent=43 // pred_check
          %p315 = pneg %p55
        $region46: #{tpu_custom_call.1} parent=43 // pred_check_branch
          %317 = sbr.rel (%p315) target = $region48
        $region47: #{tpu_custom_call.1} parent=43 // pred_region
          %p318 = scmp.lt.s32.totalorder %s28, 1
          %s319 = scalar_select %p318, %s28, 1
          %p320 = scmp.lt.s32.totalorder %s29, 0
          %s321 = scalar_select %p320, %s29, 0
          %s322 = sadd.s32 %s321, %s319
          %s323 = smul.addr %s322, 4
          %s324 = scalar_lea.vmem %s0, %s323
        $region48: #{tpu_custom_call.1} parent=43 // pred_fallthru
          _
        // Predicated region
        $region49: #{tpu_custom_call.1} parent=43 // pred_check
          %p325 = pneg %p83
        $region50: #{tpu_custom_call.1} parent=43 // pred_check_branch
          %327 = sbr.rel (%p325) target = $region52
        $region51: #{tpu_custom_call.1} parent=43 // pred_region
          %s328 = smul.u32 2, %s29
          %p329 = scmp.lt.s32.totalorder %s28, 1
          %s330 = scalar_select %p329, %s28, 1
          %p331 = scmp.lt.s32.totalorder %s328, 1
          %s332 = scalar_select %p331, %s328, 1
          %s333 = smul.addr %s330, 2
          %s334 = sadd.s32 %s332, %s333
          %s335 = smul.addr %s334, 4
          %s336 = scalar_lea.vmem %s1, %s335
          %s337 = smul.u32 2, %s29
        $region52: #{tpu_custom_call.1} parent=43 // pred_fallthru
          _
      $region44: #{tpu_custom_call.1} parent=5 // pred_fallthru
        _
      %p338 = scmp.le.s32.totalorder 1, %s21
      %p339 = scmp.lt.s32.totalorder %s21, 3
      %p340 = pnand %p338, %p339
      %p341 = pneg %p340
      // Predicated region
      $region53: #{tpu_custom_call.1} parent=5 // pred_check
        _
      $region54: #{tpu_custom_call.1} parent=5 // pred_check_branch
        %343 = sbr.rel (%p340) target = $region56
      $region55: #{tpu_custom_call.1} parent=5 // pred_region
        %s344 = ssub.s32 %s21, 1
        // Predicated region
        $region57: #{tpu_custom_call.1} parent=55 // pred_check
          %p345 = pneg %p236
        $region58: #{tpu_custom_call.1} parent=55 // pred_check_branch
          %347 = sbr.rel (%p345) target = $region60
        $region59: #{tpu_custom_call.1} parent=55 // pred_region
          %349 = dma.done [#allocation4], 2048
        $region60: #{tpu_custom_call.1} parent=55 // pred_fallthru
          _
        %p350 = scmp.lt.s32.totalorder %s30, 1
        %s351 = scalar_select %p350, %s30, 1
        %p352 = scmp.lt.s32.totalorder %s31, 0
        %s353 = scalar_select %p352, %s31, 0
        %s354 = sadd.s32 %s353, %s351
        %s355 = smul.addr %s354, 4
        %s356 = scalar_lea.vmem %s0, %s355
        %p357 = pneg %p61
        %p358 = pneg %p58
        %s359 = smul.u32 2, %s31
        %p360 = scmp.lt.s32.totalorder %s30, 1
        %s361 = scalar_select %p360, %s30, 1
        %p362 = scmp.lt.s32.totalorder %s359, 1
        %s363 = scalar_select %p362, %s359, 1
        %s364 = smul.addr %s361, 2
        %s365 = sadd.s32 %s363, %s364
        %s366 = smul.addr %s365, 4
        %s367 = scalar_lea.vmem %s1, %s366
        %p368 = pneg %p89
        %p369 = pneg %p86
        %p370 = pneg %p110
        %p371 = pneg %p107
        %p372 = pneg %p131
        %p373 = pneg %p128
        %p374 = pneg %p152
        %p375 = pneg %p149
        %p376 = pneg %p173
        %p377 = pneg %p170
        %p378 = pneg %p194
        %p379 = pneg %p191
        %p380 = pneg %p215
        %p381 = pneg %p212
        %p382 = pneg %p236
        %p383 = pneg %p233
        %p384 = pneg %p264
        %p385 = pneg %p261
        %s386 = sand.u32 %s251, 1
        %s387 = scalar_lea.sflag [#allocation5], %s386
        %s388 = sand.u32 %s251, 1
        %s389 = smul.addr %s388, 8
        %s390 = scalar_lea.vmem [#allocation6], %s389
        %p391 = scmp.lt.s32.totalorder %s30, 1
        %s392 = scalar_select %p391, %s30, 1
        %p393 = scmp.lt.s32.totalorder %s31, 0
        %s394 = scalar_select %p393, %s31, 0
        %s395 = sadd.s32 %s394, %s392
        %s396 = smul.addr %s395, 4
        %s397 = scalar_lea.vmem %s0, %s396
        %s398 = smul.u32 2, %s31
        %p399 = scmp.lt.s32.totalorder %s30, 1
        %s400 = scalar_select %p399, %s30, 1
        %p401 = scmp.lt.s32.totalorder %s398, 1
        %s402 = scalar_select %p401, %s398, 1
        %s403 = smul.addr %s400, 2
        %s404 = sadd.s32 %s402, %s403
        %s405 = smul.addr %s404, 4
        %s406 = scalar_lea.vmem %s1, %s405
        %s407 = smul.u32 2, %s31
        %s408 = smul.u32 2, %s31
        %v409 = vld [vmem:[%s406] sm:$0xff]
        %v410 = vld [vmem:[%s397] sm:$0xf]
        %v411 = vld [vmem:[%s2] sm:$0xff]
        %v412 = vld [vmem:[%s3] sm:$0xff]
        %414 = vset.pattern.permute.xlu0 0
        %415 = vperm.xlu0 %414, %v412
        %v416 = vpop.permute.xlu0 %415
        %vm418 = vcmask 31744
        %v420 = vsel %vm418, %v411, 0
        %vm422 = vcmask 1043456
        %v424 = vsel %vm422, %v410, 0
        %426 = vmatpush.msra.mxu0 0.0
        %427 = vmatpush.msra.mxu0 0.0
        %428 = vmatpush.msra.mxu0 0.0
        %429 = vmatpush.msra.mxu0 0.0
        %430 = vmatpush.msra.mxu0 0.0
        %431 = vmatpush.msra.mxu0 0.0
        %432 = vmatpush.msra.mxu0 0.0
        %433 = vmatpush.msra.mxu0 0.0
        %434 = vmatpush.msra.mxu0 0.0
        %435 = vmatpush.msra.mxu0 0.0
        %436 = vmatpush.msra.mxu0 0.0
        %437 = vmatpush.msra.mxu0 0.0
        %438 = vmatpush.msra.mxu0 0.0
        %439 = vmatpush.msra.mxu0 0.0
        %440 = vmatpush.msra.mxu0 0.0
        %441 = vmatpush.msra.mxu0 %v424
        %442 = vmatmul.f32.gmra.mxu0 %v420
        %v443 = vpop.f32.mrf.mxu0
        %v444 = vadd.f32 %v416, %v443
        %445 = vdwg.mxu0
        %v446 = vld [vmem:[#allocation3] sm:$0xff]
        %v447 = vld [vmem:[#allocation3 + $0x8] sm:$0xff]
        %v448 = vld [vmem:[#allocation3 + $0x10] sm:$0xff]
        %v449 = vld [vmem:[#allocation3 + $0x18] sm:$0xff]
        %v450 = vld [vmem:[#allocation3 + $0x20] sm:$0xff]
        %v451 = vld [vmem:[#allocation3 + $0x28] sm:$0xff]
        %v452 = vld [vmem:[#allocation3 + $0x30] sm:$0xff]
        %v453 = vld [vmem:[#allocation3 + $0x38] sm:$0xff]
        %v454 = vld [vmem:[#allocation3 + $0x40] sm:$0xff]
        %v455 = vld [vmem:[#allocation3 + $0x48] sm:$0xff]
        %v456 = vld [vmem:[#allocation3 + $0x50] sm:$0xff]
        %v457 = vld [vmem:[#allocation3 + $0x58] sm:$0xff]
        %v458 = vld [vmem:[#allocation3 + $0x60] sm:$0xff]
        %v459 = vld [vmem:[#allocation3 + $0x68] sm:$0xff]
        %v460 = vld [vmem:[#allocation3 + $0x70] sm:$0xff]
        %v461 = vld [vmem:[#allocation3 + $0x78] sm:$0xff]
        %v462 = vld [vmem:[%s4] sm:$0xff]
        %v463 = vld [vmem:[%s5] sm:$0xff]
        %465 = vset.pattern.permute.xlu0 0
        %466 = vperm.xlu0 %465, %v463
        %v467 = vpop.permute.xlu0 %466
        %470 = vst [vmem:[#allocation1] ss:$2 sm:$0xff] %v409
        %v471 = vld.sshfl [vmem:[#allocation1] sm:$0xff pattern:$0x75316420]
        %v472 = vld.sshfl [vmem:[#allocation1 + $0x8] sm:$0xff pattern:$0x75316420]
        %v474 = vsel %vm418, %v462, 0
        %v476 = vsel %vm422, %v471, 0
        %v478 = vsel %vm422, %v472, 0
        %480 = vmatpush.msra.mxu0 0.0
        %481 = vmatpush.msra.mxu0 0.0
        %482 = vmatpush.msra.mxu0 0.0
        %483 = vmatpush.msra.mxu0 0.0
        %484 = vmatpush.msra.mxu0 0.0
        %485 = vmatpush.msra.mxu0 0.0
        %486 = vmatpush.msra.mxu0 0.0
        %487 = vmatpush.msra.mxu0 0.0
        %488 = vmatpush.msra.mxu0 0.0
        %489 = vmatpush.msra.mxu0 0.0
        %490 = vmatpush.msra.mxu0 0.0
        %491 = vmatpush.msra.mxu0 0.0
        %492 = vmatpush.msra.mxu0 0.0
        %493 = vmatpush.msra.mxu0 0.0
        %494 = vmatpush.msra.mxu0 0.0
        %495 = vmatpush.msra.mxu0 %v476
        %496 = vmatmul.f32.gmra.mxu0 %v474
        %v497 = vpop.f32.mrf.mxu0
        %v498 = vadd.f32 %v467, %v497
        %499 = vdwg.mxu0
        %500 = vmatpush.msra.mxu0 0.0
        %501 = vmatpush.msra.mxu0 0.0
        %502 = vmatpush.msra.mxu0 0.0
        %503 = vmatpush.msra.mxu0 0.0
        %504 = vmatpush.msra.mxu0 0.0
        %505 = vmatpush.msra.mxu0 0.0
        %506 = vmatpush.msra.mxu0 0.0
        %507 = vmatpush.msra.mxu0 0.0
        %508 = vmatpush.msra.mxu0 0.0
        %509 = vmatpush.msra.mxu0 0.0
        %510 = vmatpush.msra.mxu0 0.0
        %511 = vmatpush.msra.mxu0 0.0
        %512 = vmatpush.msra.mxu0 0.0
        %513 = vmatpush.msra.mxu0 0.0
        %514 = vmatpush.msra.mxu0 0.0
        %515 = vmatpush.msra.mxu0 %v478
        %516 = vmatmul.f32.gmra.mxu0 %v474
        %v517 = vpop.f32.mrf.mxu0
        %v518 = vadd.f32 %v467, %v517
        %519 = vdwg.mxu0
        %vm520 = vcmask 523264
        %v522 = vsel %vm520, %v444, 0
        %524 = vmatpush.msra.mxu0 0.0
        %525 = vmatpush.msra.mxu0 0.0
        %526 = vmatpush.msra.mxu0 0.0
        %527 = vmatpush.msra.mxu0 0.0
        %528 = vmatpush.msra.mxu0 0.0
        %529 = vmatpush.msra.mxu0 0.0
        %530 = vmatpush.msra.mxu0 0.0
        %531 = vmatpush.msra.mxu0 0.0
        %532 = vmatpush.msra.mxu0 %v460
        %533 = vmatpush.msra.mxu0 %v458
        %534 = vmatpush.msra.mxu0 %v456
        %535 = vmatpush.msra.mxu0 %v454
        %536 = vmatpush.msra.mxu0 %v452
        %537 = vmatpush.msra.mxu0 %v450
        %538 = vmatpush.msra.mxu0 %v448
        %539 = vmatpush.msra.mxu0 %v446
        %540 = vmatmul.f32.gmra.mxu0 %v522
        %v541 = vpop.f32.mrf.mxu0
        %v542 = vadd.f32 %v498, %v541
        %543 = vdwg.mxu0
        %544 = vmatpush.msra.mxu0 0.0
        %545 = vmatpush.msra.mxu0 0.0
        %546 = vmatpush.msra.mxu0 0.0
        %547 = vmatpush.msra.mxu0 0.0
        %548 = vmatpush.msra.mxu0 0.0
        %549 = vmatpush.msra.mxu0 0.0
        %550 = vmatpush.msra.mxu0 0.0
        %551 = vmatpush.msra.mxu0 0.0
        %552 = vmatpush.msra.mxu0 %v461
        %553 = vmatpush.msra.mxu0 %v459
        %554 = vmatpush.msra.mxu0 %v457
        %555 = vmatpush.msra.mxu0 %v455
        %556 = vmatpush.msra.mxu0 %v453
        %557 = vmatpush.msra.mxu0 %v451
        %558 = vmatpush.msra.mxu0 %v449
        %559 = vmatpush.msra.mxu0 %v447
        %560 = vmatmul.f32.gmra.mxu0 %v522
        %v561 = vpop.f32.mrf.mxu0
        %v562 = vadd.f32 %v518, %v561
        %563 = vdwg.mxu0
        %v564 = vmax.f32 %v542, 0.0
        %v565 = vmax.f32 %v562, 0.0
        %v566 = vld [vmem:[%s6] sm:$0xff]
        %568 = vset.pattern.permute.xlu0 0
        %569 = vperm.xlu0 %568, %v566
        %v570 = vpop.permute.xlu0 %569
        %v572 = vmul.f32 %v564, %v570
        %v573 = vmul.f32 %v565, %v570
        %v574 = vrot.slane %v572, 4
        %v575 = vadd.f32 %v572, %v574
        %v576 = vrot.slane %v575, 2
        %v577 = vadd.f32 %v575, %v576
        %v578 = vrot.slane %v577, 1
        %v579 = vadd.f32 %v577, %v578
        %v580 = vrot.slane %v573, 4
        %v581 = vadd.f32 %v573, %v580
        %v582 = vrot.slane %v581, 2
        %v583 = vadd.f32 %v581, %v582
        %v584 = vrot.slane %v583, 1
        %v585 = vadd.f32 %v583, %v584
        %v586 = vld [vmem:[#allocation2] sm:$0x1]
        %588 = vset.pattern.permute.xlu0 0
        %589 = vperm.xlu0 %588, %v586
        %v590 = vpop.permute.xlu0 %589
        %v592 = vperm.slane %v590, 0
        %v593 = vadd.f32 %v579, %v592
        %v594 = vadd.f32 %v585, %v592
        %v595 = vxor.u32 %v593, 2147483648
        %v596 = vxor.u32 %v594, 2147483648
        %v597 = vmul.f32 %v595, 1.442695
        %v598 = vpow.pop %v597
        %v599 = vmul.f32 %v596, 1.442695
        %v600 = vpow.pop %v599
        %v601 = vadd.f32 %v598, 1.0
        %v602 = vadd.f32 %v600, 1.0
        %v603 = vrcp.pop %v601
        %v604 = vmul.f32 %v601, %v603
        %v605 = vsub.f32 1.0, %v604
        %v606 = vmul.f32 %v603, %v605
        %v607 = vadd.f32 %v603, %v606
        %vm608 = vweird.f32 %v601
        %vm609 = vweird.f32 %v603
        %vm610 = vmor %vm608, %vm609
        %v611 = vsel %vm610, %v603, %v607
        %v612 = vand.u32 2147483647, %v601
        %vm613 = vcmp.eq.f32.partialorder %v612, 8.507059e+37
        %v614 = vand.u32 %v601, 2147483648
        %v615 = vor.u32 1.1754944e-38, %v614
        %v616 = vsel %vm613, %v615, %v611
        %v617 = vmul.f32 1.0, %v616
        %v618 = vrcp.pop %v602
        %v619 = vmul.f32 %v602, %v618
        %v620 = vsub.f32 1.0, %v619
        %v621 = vmul.f32 %v618, %v620
        %v622 = vadd.f32 %v618, %v621
        %vm623 = vweird.f32 %v602
        %vm624 = vweird.f32 %v618
        %vm625 = vmor %vm623, %vm624
        %v626 = vsel %vm625, %v618, %v622
        %v627 = vand.u32 2147483647, %v602
        %vm628 = vcmp.eq.f32.partialorder %v627, 8.507059e+37
        %v629 = vand.u32 %v602, 2147483648
        %v630 = vor.u32 1.1754944e-38, %v629
        %v631 = vsel %vm628, %v630, %v626
        %v632 = vmul.f32 1.0, %v631
        %v635 = vrot.slane %v632, 4
        %v636 = vsel %vm422, %v617, %v635
        %v638 = vmul.f32 %v409, %v636
        %639 = vst [vmem:[%s390] sm:$0xff] %v638
        %s640 = sand.u32 %s251, 1
        %s641 = scalar_lea.sflag [#allocation5], %s640
        %s642 = sand.u32 %s251, 1
        %s643 = smul.addr %s642, 8
        %s644 = scalar_lea.vmem [#allocation6], %s643
        // Predicated region
        $region61: #{tpu_custom_call.1} parent=55 // pred_check
          %p645 = pneg %p261
        $region62: #{tpu_custom_call.1} parent=55 // pred_check_branch
          %647 = sbr.rel (%p645) target = $region64
        $region63: #{tpu_custom_call.1} parent=55 // pred_region
          %s648 = smul.u32 2, %s31
          %650 = vsyncadd %s641, 0
          %s651 = smul.addr %s30, 2
          %s652 = sadd.s32 %s648, %s651
          %s653 = smul.addr %s652, 4
          %s654 = scalar_lea.hbm %s9, %s653
          %s656 = sshll.u32 %s644, 4
          %s657 = int_to_ptr.vmem [resolvable:$true] %s656
          %s658 = sshll.u32 %s654, 4
          %s659 = int_to_ptr.hbm [resolvable:$true] %s658
          %661 = dma.vmem_to_hbm [thread:$0]  %s657, 128, %s659, %s641
        $region64: #{tpu_custom_call.1} parent=55 // pred_fallthru
          _
      $region56: #{tpu_custom_call.1} parent=5 // pred_fallthru
        _
      %p662 = scmp.le.s32.totalorder 2, %s21
      // Predicated region
      $region65: #{tpu_custom_call.1} parent=5 // pred_check
        %p663 = pneg %p662
      $region66: #{tpu_custom_call.1} parent=5 // pred_check_branch
        %665 = sbr.rel (%p663) target = $region68
      $region67: #{tpu_custom_call.1} parent=5 // pred_region
        %s666 = ssub.s32 %s21, 2
        // Predicated region
        $region69: #{tpu_custom_call.1} parent=67 // pred_check
          %p667 = pneg %p267
        $region70: #{tpu_custom_call.1} parent=67 // pred_check_branch
          %669 = sbr.rel (%p667) target = $region72
        $region71: #{tpu_custom_call.1} parent=67 // pred_region
          %s670 = sand.u32 %s252, 1
          %s671 = scalar_lea.sflag [#allocation5], %s670
          %s672 = sand.u32 %s252, 1
          %s673 = smul.addr %s672, 8
          %s674 = scalar_lea.vmem [#allocation6], %s673
          %676 = dma.done %s671, 128
        $region72: #{tpu_custom_call.1} parent=67 // pred_fallthru
          _
      $region68: #{tpu_custom_call.1} parent=5 // pred_fallthru
        _
    $region6: #{tpu_custom_call.1} parent=1 // loop_footer
      %s25 = sadd.s32 1, %s21
    $region7: #{tpu_custom_call.1} parent=1 // loop_footer_branch
      %20 = sbr.rel target = $region3
    $region8: #{tpu_custom_call.1} parent=1 // loop_exit
      _
    %677 = vsyncpa [#allocation4], 1
    %s678 = scalar_lea.sflag [#allocation4], 1
    %679 = vsyncpa %s678, 1
    %680 = vsyncpa [#allocation5], 1
    %s681 = scalar_lea.sflag [#allocation5], 1
    %682 = vsyncpa %s681, 1

</llo_original>
